<compile_context>
chip_gen: v7x
topology: tpu7x:2x2x1
jax: 0.10.0
libtpu: 0.0.40
codegen_flags: <defaults>
</compile_context>

<pallas_src>
import functools

import jax
import jax.numpy as jnp
from jax.experimental import pallas as pl
from jax.experimental.pallas import tpu as pltpu


def _round_up(x, m):
    return (x + m - 1) // m * m


def _linear_kernel(x_ref, w_ref, b_ref, o_ref, acc_ref, *, act):
    # x_ref: (tm, tk)  activations tile
    # w_ref: (tk, tn)  pre-transposed weight tile (K, N)
    # b_ref: (1, tn)   bias tile
    # o_ref: (tm, tn)  output tile
    k = pl.program_id(2)

    @pl.when(k == 0)
    def _():
        acc_ref[...] = jnp.zeros_like(acc_ref)

    # MXU matmul on native-dtype operands, f32 accumulation.
    acc_ref[...] += jnp.dot(x_ref[...], w_ref[...],
                            preferred_element_type=jnp.float32)

    @pl.when(k == pl.num_programs(2) - 1)
    def _():
        y = acc_ref[...] + b_ref[...].astype(jnp.float32)
        if act == "relu":
            y = jnp.maximum(y, 0.0)
        elif act is not None:
            # TODO(synk): only ReLU (and identity) epilogues are fused here.
            raise NotImplementedError(f"act_func={act}")
        o_ref[...] = y.astype(o_ref.dtype)


def linear_layer(x, weight, bias, *, act_func=None, tm=512, tn=256, tk=512):
    """Fused LinearLayer forward.

    x:      (B, ...)  -> flattened to (B, in_features) like torch.flatten(x, 1)
    weight: (out_features, in_features)   (PyTorch nn.Linear layout)
    bias:   (out_features,)
    act_func: None or "relu"
    """
    # _try_squeeze: flatten everything but the batch dim (free reshape, no
    # HBM transpose pass needed).
    if x.ndim > 2:
        x = x.reshape(x.shape[0], -1)
    m, k = x.shape
    n, k_w = weight.shape
    assert k == k_w, "in_features mismatch"

    # dropout (p=0 / eval) is identity; norm=None -> nothing to fuse.

    # Tile sizes: clamp to the (padded) problem, keep sublane/lane alignment.
    tm = min(tm, _round_up(m, 8))
    tn = min(tn, _round_up(n, 128))   # lane-dense output (multiple of 128)
    tk = min(tk, _round_up(k, 128))

    mp = _round_up(m, tm)
    np_ = _round_up(n, tn)
    kp = _round_up(k, tk)

    # Ragged tails handled by zero-padding (zeros in K contribute nothing to
    # the dot product; padded M/N rows/cols are sliced off at the end).
    x_p = jnp.pad(x, ((0, mp - m), (0, kp - k)))
    w_t = jnp.pad(weight.T, ((0, kp - k), (0, np_ - n)))   # (K, N), transposed once
    b_p = jnp.pad(bias, (0, np_ - n)).reshape(1, np_)

    grid = (mp // tm, np_ // tn, kp // tk)

    out = pl.pallas_call(
        functools.partial(_linear_kernel, act=act_func),
        out_shape=jax.ShapeDtypeStruct((mp, np_), x.dtype),
        grid_spec=pltpu.PrefetchScalarGridSpec(
            num_scalar_prefetch=0,
            grid=grid,
            in_specs=[
                pl.BlockSpec((tm, tk), lambda i, j, kk: (i, kk)),   # x tile
                pl.BlockSpec((tk, tn), lambda i, j, kk: (kk, j)),   # W^T tile
                pl.BlockSpec((1, tn), lambda i, j, kk: (0, j)),     # bias tile
            ],
            out_specs=pl.BlockSpec((tm, tn), lambda i, j, kk: (i, j)),
            scratch_shapes=[pltpu.VMEM((tm, tn), jnp.float32)],     # f32 acc
        ),
        compiler_params=pltpu.CompilerParams(
            # M/N tiles are independent ("parallel" -> shard across v7x's 2
            # TCs when the grid has >= 2 such steps); K is the reduction.
            dimension_semantics=("parallel", "parallel", "arbitrary"),
            # Explicit VMEM budget; tiles above are ~1-2 MiB double-buffered,
            # so this is comfortable even on v7x's 64 MiB VMEM.
            vmem_limit_bytes=32 * 1024 * 1024,
        ),
    )(x_p, w_t, b_p)

    return out[:m, :n]


def _reference(x, weight, bias, act=None):
    # Pure-JAX reference of the same forward pass.
    x2 = x.reshape(x.shape[0], -1) if x.ndim > 2 else x
    y = jnp.dot(x2.astype(jnp.float32), weight.astype(jnp.float32).T,
                precision=jax.lax.Precision.HIGHEST) + bias.astype(jnp.float32)
    if act == "relu":
        y = jnp.maximum(y, 0.0)
    return y.astype(x.dtype)


if __name__ == "__main__":
    key = jax.random.PRNGKey(0)
    kx, kw, kb = jax.random.split(key, 3)

    # Small shapes consistent with the module: a 4-D input that the layer
    # flattens to (batch, in_features) = (2, 1024), projecting to 256 features.
    B, C, H, W = 2, 4, 16, 16
    IN_F, OUT_F = C * H * W, 256

    x = jax.random.normal(kx, (B, C, H, W), dtype=jnp.float32)
    weight = jax.random.normal(kw, (OUT_F, IN_F), dtype=jnp.float32) / jnp.sqrt(IN_F)
    bias = jax.random.normal(kb, (OUT_F,), dtype=jnp.float32) * 0.1

    # Default instantiation (act_func=None) plus the fused-ReLU variant.
    for act in (None, "relu"):
        out = jax.block_until_ready(linear_layer(x, weight, bias, act_func=act))
        ref = _reference(x, weight, bias, act)
        assert out.shape == (B, OUT_F)
        assert jnp.allclose(out, ref, atol=1e-3, rtol=1e-3), (
            "max abs err:", float(jnp.max(jnp.abs(out - ref))))

    print("KERNEL_OK")
</pallas_src>

<mosaic_0001>
module attributes {stable_mosaic.version = 11 : i64} {
  func.func @_linear_kernel(%arg0: i32, %arg1: i32, %arg2: i32, %arg3: memref<8x512xf32, #tpu.memory_space<vmem>>, %arg4: memref<512x256xf32, #tpu.memory_space<vmem>>, %arg5: memref<1x256xf32, #tpu.memory_space<vmem>>, %arg6: memref<8x256xf32, #tpu.memory_space<vmem>>, %arg7: memref<8x256xf32, #tpu.memory_space<vmem>>) attributes {dimension_semantics = [#tpu.dimension_semantics<parallel>, #tpu.dimension_semantics<parallel>, #tpu.dimension_semantics<arbitrary>], iteration_bounds = array<i64: 1, 1, 2>, scalar_prefetch = 0 : i64, scratch_operands = 1 : i64, tpu.core_type = #tpu.core_type<tc>, window_params = [{transform_indices = @transform_0, window_bounds = array<i64: 8, 512>}, {transform_indices = @transform_1, window_bounds = array<i64: 512, 256>}, {transform_indices = @transform_2, window_bounds = array<i64: 1, 256>}, {transform_indices = @transform_3, window_bounds = array<i64: 8, 256>}]} {
    %c0_i32 = arith.constant 0 : i32
    %0 = arith.cmpi eq, %arg2, %c0_i32 : i32
    %1 = arith.extui %0 : i1 to i32
    %c0_i32_0 = arith.constant 0 : i32
    %2 = arith.cmpi ne, %1, %c0_i32_0 : i32
    scf.if %2 {
      %cst_9 = arith.constant 0.000000e+00 : f32
      %12 = vector.broadcast %cst_9 : f32 to vector<8x256xf32>
      %c0_10 = arith.constant 0 : index
      %c0_11 = arith.constant 0 : index
      %13 = vector.load %arg7[%c0_10, %c0_11] : memref<8x256xf32, #tpu.memory_space<vmem>>, vector<8x256xf32>
      tpu.vector_store %arg7[%c0_10, %c0_11], %12 {strides = array<i32>} : memref<8x256xf32, #tpu.memory_space<vmem>>, vector<8x256xf32>,
    } else {
    }
    %c0 = arith.constant 0 : index
    %c0_1 = arith.constant 0 : index
    %3 = vector.load %arg7[%c0, %c0_1] : memref<8x256xf32, #tpu.memory_space<vmem>>, vector<8x256xf32>
    %c0_2 = arith.constant 0 : index
    %c0_3 = arith.constant 0 : index
    %4 = vector.load %arg3[%c0_2, %c0_3] : memref<8x512xf32, #tpu.memory_space<vmem>>, vector<8x512xf32>
    %c0_4 = arith.constant 0 : index
    %c0_5 = arith.constant 0 : index
    %5 = vector.load %arg4[%c0_4, %c0_5] : memref<512x256xf32, #tpu.memory_space<vmem>>, vector<512x256xf32>
    %cst = arith.constant dense<0.000000e+00> : vector<8x256xf32>
    %6 = tpu.matmul %4, %5, %cst {dimension_numbers = #tpu.dot_dimension_numbers<[1], [0], [0], [1], [0, 0, 1, 1], [], []>} : vector<8x512xf32>, vector<512x256xf32>, vector<8x256xf32> -> vector<8x256xf32>
    %7 = arith.addf %3, %6 : vector<8x256xf32>
    %c0_6 = arith.constant 0 : index
    %c0_7 = arith.constant 0 : index
    %8 = vector.load %arg7[%c0_6, %c0_7] : memref<8x256xf32, #tpu.memory_space<vmem>>, vector<8x256xf32>
    tpu.vector_store %arg7[%c0_6, %c0_7], %7 {strides = array<i32>} : memref<8x256xf32, #tpu.memory_space<vmem>>, vector<8x256xf32>,
    %c1_i32 = arith.constant 1 : i32
    %9 = arith.cmpi eq, %arg2, %c1_i32 : i32
    %10 = arith.extui %9 : i1 to i32
    %c0_i32_8 = arith.constant 0 : i32
    %11 = arith.cmpi ne, %10, %c0_i32_8 : i32
    scf.if %11 {
      %c0_9 = arith.constant 0 : index
      %c0_10 = arith.constant 0 : index
      %12 = vector.load %arg7[%c0_9, %c0_10] : memref<8x256xf32, #tpu.memory_space<vmem>>, vector<8x256xf32>
      %c0_11 = arith.constant 0 : index
      %c0_12 = arith.constant 0 : index
      %13 = vector.load %arg5[%c0_11, %c0_12] : memref<1x256xf32, #tpu.memory_space<vmem>>, vector<1x256xf32>
      %14 = vector.broadcast %13 : vector<1x256xf32> to vector<8x256xf32>
      %15 = arith.addf %12, %14 : vector<8x256xf32>
      %c0_13 = arith.constant 0 : index
      %c0_14 = arith.constant 0 : index
      %16 = vector.load %arg6[%c0_13, %c0_14] : memref<8x256xf32, #tpu.memory_space<vmem>>, vector<8x256xf32>
      tpu.vector_store %arg6[%c0_13, %c0_14], %15 {strides = array<i32>} : memref<8x256xf32, #tpu.memory_space<vmem>>, vector<8x256xf32>,
    } else {
    }
    return
  }
  func.func @transform_0(%arg0: i32, %arg1: i32, %arg2: i32) -> (i32, i32) {
    %c0_i32 = arith.constant 0 : i32
    return %arg0, %arg2 : i32, i32
  }
  func.func @transform_1(%arg0: i32, %arg1: i32, %arg2: i32) -> (i32, i32) {
    %c0_i32 = arith.constant 0 : i32
    return %arg2, %arg1 : i32, i32
  }
  func.func @transform_2(%arg0: i32, %arg1: i32, %arg2: i32) -> (i32, i32) {
    %c0_i32 = arith.constant 0 : i32
    %c0_i32_0 = arith.constant 0 : i32
    return %c0_i32, %arg1 : i32, i32
  }
  func.func @transform_3(%arg0: i32, %arg1: i32, %arg2: i32) -> (i32, i32) {
    %c0_i32 = arith.constant 0 : i32
    return %arg0, %arg1 : i32, i32
  }
}

</mosaic_0001>

<llo_original>
// kernel: tpu_custom_call.1
$region0: #{tpu_custom_call.1}
  #allocation0 [shape = 'u32[]', space=smem, size = 0x4, offset = 0x4, fixed_abs, tag = 'smem constant byte address 0x4 - core index']
  #allocation1 [shape = 'u32[144,128]{1,0:T(1,128)}', space=vmem, size = 0x12000, scoped, tag = 'internal scratch']
  #allocation2 [shape = 'f32[8,256]{1,0:T(8,128)}', space=vmem, size = 0x2000, scoped, tag = 'scratch operand']
  %s0 = inlined_call_operand.hbm [shape: f32[8,1024], index: 0, kind: input, shape index: {}]
  %s1 = inlined_call_operand.hbm [shape: f32[1024,256], index: 1, kind: input, shape index: {}]
  %s2 = inlined_call_operand.vmem [shape: f32[1,256], index: 2, kind: input, shape index: {}]
  %s3 = inlined_call_operand.hbm [shape: f32[8,256], index: 3, kind: output, shape index: {}]
  %s4 = sld [smem:[#allocation0]]
  $region61: #{tpu_custom_call.1} parent=0
    _
  %s6 = ssub.s32 1, %s4
  %s7 = scalar_select 0, %s6, %s4
  $region1: #{tpu_custom_call.1} parent=0
    #allocation3 [shape = 'u8[32768]{0}', space=vmem, size = 0x8000, scoped, tag = 'input window, operand 0']
    #allocation4 [shape = 's32[2]{0}', space=sflag, size = 0x8, scoped, tag = 'scoped memory for tpu_custom_call.1']
    #allocation5 [shape = 's32[2]{0}', space=sflag, size = 0x8, scoped, tag = 'scoped memory for tpu_custom_call.1']
    #allocation6 [shape = 'u8[1048576]{0}', space=vmem, size = 0x100000, scoped, tag = 'input window, operand 1']
    #allocation7 [shape = 's32[2]{0}', space=sflag, size = 0x8, scoped, tag = 'scoped memory for tpu_custom_call.1']
    #allocation8 [shape = 'u8[8192]{0}', space=vmem, size = 0x2000, scoped, tag = 'output window, operand 0, single buffered']
    %8 = vsyncpa [#allocation4], 0
    %s9 = scalar_lea.sflag [#allocation4], 1
    %10 = vsyncpa %s9, 0
    %11 = vsyncpa [#allocation7], 0
    %s12 = scalar_lea.sflag [#allocation7], 1
    %13 = vsyncpa %s12, 0
    %14 = vsyncpa [#allocation5], 0
    loop: start=0, step=1, limit=4
    $region2: #{tpu_custom_call.1} parent=1 // loop_pre_header
      _
    $region3: #{tpu_custom_call.1} parent=1 // loop_header
      %s16 = sphi 0, %s20
      %p17 = scmp.ge.s32.totalorder %s16, 4
      %s23 = sphi 0, %s42
      %s24 = sphi 0, %s38
      %s25 = sphi 0, %s34
      %s26 = sphi 0, %s23
      %s27 = sphi 0, %s24
      %s28 = sphi 0, %s25
      %s29 = sphi 0, %s26
      %s30 = sphi 0, %s27
      %s31 = sphi 0, %s28
      %s47 = sphi 0, %s49
      %s50 = sphi 0, %s47
      %s51 = sphi 0, %s50
      %s67 = sphi 0, %s51
      %s75 = sphi 0, %s77
      %s78 = sphi 0, %s75
      %s79 = sphi 0, %s78
      %s95 = sphi 0, %s79
      %s101 = sphi 0, %s103
      %s104 = sphi 0, %s101
      %s105 = sphi 0, %s104
      %s121 = sphi 0, %s105
      %s129 = sphi 0, %s131
      %s132 = sphi 0, %s129
      %s133 = sphi 0, %s132
      %s149 = sphi 0, %s133
    $region4: #{tpu_custom_call.1} parent=1 // loop_header_branch
      %19 = sbr.rel (%p17) target = $region8
    $region5: #{tpu_custom_call.1} parent=1 // loop_body
      %s21 = ssub.s32 %s16, 1
      %s22 = ssub.s32 %s16, 2
      %s32 = sadd.s32 1, %s25
      %p33 = scmp.ge.s32.totalorder %s32, 2
      %s34 = scalar_select %p33, 0, %s32
      %s35 = sadd.s32 1, %s24
      %s36 = scalar_select %p33, %s35, %s24
      %p37 = scmp.ge.s32.totalorder %s36, 1
      %s38 = scalar_select %p37, 0, %s36
      %s39 = sadd.s32 1, %s23
      %s40 = scalar_select %p37, %s39, %s23
      %p41 = scmp.ge.s32.totalorder %s40, 1
      %s42 = scalar_select %p41, 0, %s40
      %s43 = ssub.s32 %s23, %s42
      %s44 = ssub.s32 %s25, %s34
      %s45 = sor.u32 %s43, %s44
      %p46 = scmp.eq.s32.totalorder %s45, 0
      %s48 = sadd.s32 %s47, 1
      %s49 = scalar_select %p46, %s47, %s48
      %p52 = pneg %p46
      %p53 = scmp.eq.s32.totalorder %s16, 1
      %p54 = por %p52, %p53
      %p55 = scmp.ne.s32.totalorder %s47, %s50
      %p56 = scmp.eq.s32.totalorder %s16, 0
      %p57 = por %p55, %p56
      %p58 = scmp.ne.s32.totalorder %s47, %s50
      %p59 = scmp.eq.s32.totalorder %s21, 1
      %p60 = por %p58, %p59
      %p61 = scmp.ne.s32.totalorder %s50, %s51
      %p62 = scmp.eq.s32.totalorder %s21, 0
      %p63 = por %p61, %p62
      %p64 = scmp.ne.s32.totalorder %s50, %s51
      %p65 = scmp.eq.s32.totalorder %s22, 1
      %p66 = por %p64, %p65
      %p68 = scmp.ne.s32.totalorder %s51, %s67
      %p69 = scmp.eq.s32.totalorder %s22, 0
      %p70 = por %p68, %p69
      %s71 = ssub.s32 %s25, %s34
      %s72 = ssub.s32 %s24, %s38
      %s73 = sor.u32 %s71, %s72
      %p74 = scmp.eq.s32.totalorder %s73, 0
      %s76 = sadd.s32 %s75, 1
      %s77 = scalar_select %p74, %s75, %s76
      %p80 = pneg %p74
      %p81 = scmp.eq.s32.totalorder %s16, 1
      %p82 = por %p80, %p81
      %p83 = scmp.ne.s32.totalorder %s75, %s78
      %p84 = scmp.eq.s32.totalorder %s16, 0
      %p85 = por %p83, %p84
      %p86 = scmp.ne.s32.totalorder %s75, %s78
      %p87 = scmp.eq.s32.totalorder %s21, 1
      %p88 = por %p86, %p87
      %p89 = scmp.ne.s32.totalorder %s78, %s79
      %p90 = scmp.eq.s32.totalorder %s21, 0
      %p91 = por %p89, %p90
      %p92 = scmp.ne.s32.totalorder %s78, %s79
      %p93 = scmp.eq.s32.totalorder %s22, 1
      %p94 = por %p92, %p93
      %p96 = scmp.ne.s32.totalorder %s79, %s95
      %p97 = scmp.eq.s32.totalorder %s22, 0
      %p98 = por %p96, %p97
      %s99 = ssub.s32 %s24, %s38
      %p100 = scmp.eq.s32.totalorder %s99, 0
      %s102 = sadd.s32 %s101, 1
      %s103 = scalar_select %p100, %s101, %s102
      %p106 = pneg %p100
      %p107 = scmp.eq.s32.totalorder %s16, 1
      %p108 = por %p106, %p107
      %p109 = scmp.ne.s32.totalorder %s101, %s104
      %p110 = scmp.eq.s32.totalorder %s16, 0
      %p111 = por %p109, %p110
      %p112 = scmp.ne.s32.totalorder %s101, %s104
      %p113 = scmp.eq.s32.totalorder %s21, 1
      %p114 = por %p112, %p113
      %p115 = scmp.ne.s32.totalorder %s104, %s105
      %p116 = scmp.eq.s32.totalorder %s21, 0
      %p117 = por %p115, %p116
      %p118 = scmp.ne.s32.totalorder %s104, %s105
      %p119 = scmp.eq.s32.totalorder %s22, 1
      %p120 = por %p118, %p119
      %p122 = scmp.ne.s32.totalorder %s105, %s121
      %p123 = scmp.eq.s32.totalorder %s22, 0
      %p124 = por %p122, %p123
      %s125 = ssub.s32 %s23, %s42
      %s126 = ssub.s32 %s24, %s38
      %s127 = sor.u32 %s125, %s126
      %p128 = scmp.eq.s32.totalorder %s127, 0
      %s130 = sadd.s32 %s129, 1
      %s131 = scalar_select %p128, %s129, %s130
      %p134 = pneg %p128
      %p135 = scmp.eq.s32.totalorder %s16, 1
      %p136 = por %p134, %p135
      %p137 = scmp.ne.s32.totalorder %s129, %s132
      %p138 = scmp.eq.s32.totalorder %s16, 0
      %p139 = por %p137, %p138
      %p140 = scmp.ne.s32.totalorder %s129, %s132
      %p141 = scmp.eq.s32.totalorder %s21, 1
      %p142 = por %p140, %p141
      %p143 = scmp.ne.s32.totalorder %s132, %s133
      %p144 = scmp.eq.s32.totalorder %s21, 0
      %p145 = por %p143, %p144
      %p146 = scmp.ne.s32.totalorder %s132, %s133
      %p147 = scmp.eq.s32.totalorder %s22, 1
      %p148 = por %p146, %p147
      %p150 = scmp.ne.s32.totalorder %s133, %s149
      %p151 = scmp.eq.s32.totalorder %s22, 0
      %p152 = por %p150, %p151
      %p153 = scmp.le.s32.totalorder 1, %s16
      %p154 = scmp.lt.s32.totalorder %s16, 3
      %p155 = pnand %p153, %p154
      %p156 = pneg %p155
      // Predicated region
      $region9: #{tpu_custom_call.1} parent=5 // pred_check
        _
      $region10: #{tpu_custom_call.1} parent=5 // pred_check_branch
        %158 = sbr.rel (%p155) target = $region12
      $region11: #{tpu_custom_call.1} parent=5 // pred_region
        %s159 = ssub.s32 %s16, 1
        // Predicated region
        $region13: #{tpu_custom_call.1} parent=11 // pred_check
          %p160 = pneg %p117
        $region14: #{tpu_custom_call.1} parent=11 // pred_check_branch
          %162 = sbr.rel (%p160) target = $region16
        $region15: #{tpu_custom_call.1} parent=11 // pred_region
          %s163 = smul.u32 2, %s27
          %p164 = scmp.lt.s32.totalorder %s163, 1
          %s165 = scalar_select %p164, %s163, 1
          %s166 = scalar_lea.vmem %s2, %s165
          %s167 = smul.u32 2, %s27
        $region16: #{tpu_custom_call.1} parent=11 // pred_fallthru
          _
      $region12: #{tpu_custom_call.1} parent=5 // pred_fallthru
        _
      %p168 = scmp.lt.s32.totalorder %s16, 2
      // Predicated region
      $region17: #{tpu_custom_call.1} parent=5 // pred_check
        %p169 = pneg %p168
      $region18: #{tpu_custom_call.1} parent=5 // pred_check_branch
        %171 = sbr.rel (%p169) target = $region20
      $region19: #{tpu_custom_call.1} parent=5 // pred_region
        // Predicated region
        $region21: #{tpu_custom_call.1} parent=19 // pred_check
          %p172 = pneg %p57
        $region22: #{tpu_custom_call.1} parent=19 // pred_check_branch
          %174 = sbr.rel (%p172) target = $region24
        $region23: #{tpu_custom_call.1} parent=19 // pred_region
          %s175 = sand.u32 %s47, 1
          %s176 = scalar_lea.sflag [#allocation4], %s175
          %s177 = sand.u32 %s47, 1
          %s178 = smul.addr %s177, 32
          %s179 = scalar_lea.vmem [#allocation3], %s178
          %s180 = smul.u32 4, %s25
          %s182 = ssub.s32 512, 512
          %183 = vsyncadd %s176, %s182
          %s184 = smul.addr %s23, 8
          %s185 = sadd.s32 %s180, %s184
          %s186 = smul.addr %s185, 128
          %s187 = scalar_lea.hbm %s0, %s186
          %s189 = sshll.u32 %s179, 4
          %s190 = int_to_ptr.vmem [resolvable:$true] %s189
          %192 = dma.hbm_to_vmem [thread:$0]  %s187, 512, %s190, %s176
        $region24: #{tpu_custom_call.1} parent=19 // pred_fallthru
          _
        // Predicated region
        $region25: #{tpu_custom_call.1} parent=19 // pred_check
          %p193 = pneg %p85
        $region26: #{tpu_custom_call.1} parent=19 // pred_check_branch
          %195 = sbr.rel (%p193) target = $region28
        $region27: #{tpu_custom_call.1} parent=19 // pred_region
          %s196 = sand.u32 %s75, 1
          %s197 = scalar_lea.sflag [#allocation7], %s196
          %s198 = sand.u32 %s75, 1
          %s199 = smul.addr %s198, 1024
          %s200 = scalar_lea.vmem [#allocation6], %s199
          %s201 = smul.u32 64, %s25
          %s202 = smul.u32 2, %s24
          %s204 = ssub.s32 16384, 16384
          %205 = vsyncadd %s197, %s204
          %s206 = smul.addr %s201, 2
          %s207 = sadd.s32 %s202, %s206
          %s208 = smul.addr %s207, 128
          %s209 = scalar_lea.hbm %s1, %s208
          %s210 = sshll.u32 %s200, 4
          %s211 = int_to_ptr.vmem [resolvable:$true] %s210
          %216 = dma.hbm_to_vmem [thread:$0]  %s209, 16384, %s211, %s197, 256, 256, 16
        $region28: #{tpu_custom_call.1} parent=19 // pred_fallthru
          _
      $region20: #{tpu_custom_call.1} parent=5 // pred_fallthru
        _
      %p217 = scmp.le.s32.totalorder 1, %s16
      %p218 = scmp.lt.s32.totalorder %s16, 3
      %p219 = pnand %p217, %p218
      %p220 = pneg %p219
      // Predicated region
      $region29: #{tpu_custom_call.1} parent=5 // pred_check
        _
      $region30: #{tpu_custom_call.1} parent=5 // pred_check_branch
        %222 = sbr.rel (%p219) target = $region32
      $region31: #{tpu_custom_call.1} parent=5 // pred_region
        %s223 = ssub.s32 %s16, 1
        %s224 = sand.u32 %s50, 1
        %s225 = scalar_lea.sflag [#allocation4], %s224
        %s226 = sand.u32 %s50, 1
        %s227 = smul.addr %s226, 32
        %s228 = scalar_lea.vmem [#allocation3], %s227
        // Predicated region
        $region33: #{tpu_custom_call.1} parent=31 // pred_check
          %p229 = pneg %p63
        $region34: #{tpu_custom_call.1} parent=31 // pred_check_branch
          %231 = sbr.rel (%p229) target = $region36
        $region35: #{tpu_custom_call.1} parent=31 // pred_region
          %232 = dma.done %s225, 512
        $region36: #{tpu_custom_call.1} parent=31 // pred_fallthru
          _
        %s233 = sand.u32 %s78, 1
        %s234 = scalar_lea.sflag [#allocation7], %s233
        %s235 = sand.u32 %s78, 1
        %s236 = smul.addr %s235, 1024
        %s237 = scalar_lea.vmem [#allocation6], %s236
        // Predicated region
        $region37: #{tpu_custom_call.1} parent=31 // pred_check
          %p238 = pneg %p91
        $region38: #{tpu_custom_call.1} parent=31 // pred_check_branch
          %240 = sbr.rel (%p238) target = $region40
        $region39: #{tpu_custom_call.1} parent=31 // pred_region
          %241 = dma.done %s234, 16384
        $region40: #{tpu_custom_call.1} parent=31 // pred_fallthru
          _
        %s242 = sand.u32 %s50, 1
        %s243 = scalar_lea.sflag [#allocation4], %s242
        %s244 = sand.u32 %s50, 1
        %s245 = smul.addr %s244, 32
        %s246 = scalar_lea.vmem [#allocation3], %s245
        %p247 = pneg %p63
        %p248 = pneg %p60
        %s249 = sand.u32 %s78, 1
        %s250 = scalar_lea.sflag [#allocation7], %s249
        %s251 = sand.u32 %s78, 1
        %s252 = smul.addr %s251, 1024
        %s253 = scalar_lea.vmem [#allocation6], %s252
        %p254 = pneg %p91
        %p255 = pneg %p88
        %s256 = smul.u32 2, %s27
        %p257 = scmp.lt.s32.totalorder %s256, 1
        %s258 = scalar_select %p257, %s256, 1
        %s259 = scalar_lea.vmem %s2, %s258
        %p260 = pneg %p117
        %p261 = pneg %p114
        %p262 = pneg %p145
        %p263 = pneg %p142
        %s264 = smul.u32 4, %s28
        %s265 = smul.u32 64, %s28
        %s266 = smul.u32 2, %s27
        %s267 = smul.u32 2, %s27
        %p268 = scmp.lt.s32.totalorder %s267, 1
        %s269 = scalar_select %p268, %s267, 1
        %s270 = scalar_lea.vmem %s2, %s269
        %s271 = smul.u32 2, %s27
        %s272 = smul.u32 2, %s27
        %p273 = scmp.eq.s32.totalorder %s28, 0
        // Predicated region
        $region41: #{tpu_custom_call.1} parent=31 // pred_check
          %p274 = pneg %p273
        $region42: #{tpu_custom_call.1} parent=31 // pred_check_branch
          %276 = sbr.rel (%p274) target = $region44
        $region43: #{tpu_custom_call.1} parent=31 // pred_region
          %277 = vst [vmem:[#allocation2] sm:$0xff] 0.0
          %278 = vst [vmem:[#allocation2 + $0x8] sm:$0xff] 0.0
        $region44: #{tpu_custom_call.1} parent=31 // pred_fallthru
          _
        %v279 = vld [vmem:[#allocation2] sm:$0xff]
        %v280 = vld [vmem:[#allocation2 + $0x8] sm:$0xff]
        %v281 = vld [vmem:[%s228] sm:$0xff]
        %v282 = vld [vmem:[%s228 + $0x8] sm:$0xff]
        %v283 = vld [vmem:[%s228 + $0x10] sm:$0xff]
        %v284 = vld [vmem:[%s228 + $0x18] sm:$0xff]
        %v285 = vld [vmem:[%s237] sm:$0xff]
        %v286 = vld [vmem:[%s237 + $0x8] sm:$0xff]
        %v287 = vld [vmem:[%s237 + $0x10] sm:$0xff]
        %v288 = vld [vmem:[%s237 + $0x18] sm:$0xff]
        %v289 = vld [vmem:[%s237 + $0x20] sm:$0xff]
        %v290 = vld [vmem:[%s237 + $0x28] sm:$0xff]
        %v291 = vld [vmem:[%s237 + $0x30] sm:$0xff]
        %v292 = vld [vmem:[%s237 + $0x38] sm:$0xff]
        %v293 = vld [vmem:[%s237 + $0x40] sm:$0xff]
        %v294 = vld [vmem:[%s237 + $0x48] sm:$0xff]
        %v295 = vld [vmem:[%s237 + $0x50] sm:$0xff]
        %v296 = vld [vmem:[%s237 + $0x58] sm:$0xff]
        %v297 = vld [vmem:[%s237 + $0x60] sm:$0xff]
        %v298 = vld [vmem:[%s237 + $0x68] sm:$0xff]
        %v299 = vld [vmem:[%s237 + $0x70] sm:$0xff]
        %v300 = vld [vmem:[%s237 + $0x78] sm:$0xff]
        %v301 = vld [vmem:[%s237 + $0x80] sm:$0xff]
        %v302 = vld [vmem:[%s237 + $0x88] sm:$0xff]
        %v303 = vld [vmem:[%s237 + $0x90] sm:$0xff]
        %v304 = vld [vmem:[%s237 + $0x98] sm:$0xff]
        %v305 = vld [vmem:[%s237 + $0xa0] sm:$0xff]
        %v306 = vld [vmem:[%s237 + $0xa8] sm:$0xff]
        %v307 = vld [vmem:[%s237 + $0xb0] sm:$0xff]
        %v308 = vld [vmem:[%s237 + $0xb8] sm:$0xff]
        %v309 = vld [vmem:[%s237 + $0xc0] sm:$0xff]
        %v310 = vld [vmem:[%s237 + $0xc8] sm:$0xff]
        %v311 = vld [vmem:[%s237 + $0xd0] sm:$0xff]
        %v312 = vld [vmem:[%s237 + $0xd8] sm:$0xff]
        %v313 = vld [vmem:[%s237 + $0xe0] sm:$0xff]
        %v314 = vld [vmem:[%s237 + $0xe8] sm:$0xff]
        %v315 = vld [vmem:[%s237 + $0xf0] sm:$0xff]
        %v316 = vld [vmem:[%s237 + $0xf8] sm:$0xff]
        %v317 = vld [vmem:[%s237 + $0x100] sm:$0xff]
        %v318 = vld [vmem:[%s237 + $0x108] sm:$0xff]
        %v319 = vld [vmem:[%s237 + $0x110] sm:$0xff]
        %v320 = vld [vmem:[%s237 + $0x118] sm:$0xff]
        %v321 = vld [vmem:[%s237 + $0x120] sm:$0xff]
        %v322 = vld [vmem:[%s237 + $0x128] sm:$0xff]
        %v323 = vld [vmem:[%s237 + $0x130] sm:$0xff]
        %v324 = vld [vmem:[%s237 + $0x138] sm:$0xff]
        %v325 = vld [vmem:[%s237 + $0x140] sm:$0xff]
        %v326 = vld [vmem:[%s237 + $0x148] sm:$0xff]
        %v327 = vld [vmem:[%s237 + $0x150] sm:$0xff]
        %v328 = vld [vmem:[%s237 + $0x158] sm:$0xff]
        %v329 = vld [vmem:[%s237 + $0x160] sm:$0xff]
        %v330 = vld [vmem:[%s237 + $0x168] sm:$0xff]
        %v331 = vld [vmem:[%s237 + $0x170] sm:$0xff]
        %v332 = vld [vmem:[%s237 + $0x178] sm:$0xff]
        %v333 = vld [vmem:[%s237 + $0x180] sm:$0xff]
        %v334 = vld [vmem:[%s237 + $0x188] sm:$0xff]
        %v335 = vld [vmem:[%s237 + $0x190] sm:$0xff]
        %v336 = vld [vmem:[%s237 + $0x198] sm:$0xff]
        %v337 = vld [vmem:[%s237 + $0x1a0] sm:$0xff]
        %v338 = vld [vmem:[%s237 + $0x1a8] sm:$0xff]
        %v339 = vld [vmem:[%s237 + $0x1b0] sm:$0xff]
        %v340 = vld [vmem:[%s237 + $0x1b8] sm:$0xff]
        %v341 = vld [vmem:[%s237 + $0x1c0] sm:$0xff]
        %v342 = vld [vmem:[%s237 + $0x1c8] sm:$0xff]
        %v343 = vld [vmem:[%s237 + $0x1d0] sm:$0xff]
        %v344 = vld [vmem:[%s237 + $0x1d8] sm:$0xff]
        %v345 = vld [vmem:[%s237 + $0x1e0] sm:$0xff]
        %v346 = vld [vmem:[%s237 + $0x1e8] sm:$0xff]
        %v347 = vld [vmem:[%s237 + $0x1f0] sm:$0xff]
        %v348 = vld [vmem:[%s237 + $0x1f8] sm:$0xff]
        %v349 = vld [vmem:[%s237 + $0x200] sm:$0xff]
        %v350 = vld [vmem:[%s237 + $0x208] sm:$0xff]
        %v351 = vld [vmem:[%s237 + $0x210] sm:$0xff]
        %v352 = vld [vmem:[%s237 + $0x218] sm:$0xff]
        %v353 = vld [vmem:[%s237 + $0x220] sm:$0xff]
        %v354 = vld [vmem:[%s237 + $0x228] sm:$0xff]
        %v355 = vld [vmem:[%s237 + $0x230] sm:$0xff]
        %v356 = vld [vmem:[%s237 + $0x238] sm:$0xff]
        %v357 = vld [vmem:[%s237 + $0x240] sm:$0xff]
        %v358 = vld [vmem:[%s237 + $0x248] sm:$0xff]
        %v359 = vld [vmem:[%s237 + $0x250] sm:$0xff]
        %v360 = vld [vmem:[%s237 + $0x258] sm:$0xff]
        %v361 = vld [vmem:[%s237 + $0x260] sm:$0xff]
        %v362 = vld [vmem:[%s237 + $0x268] sm:$0xff]
        %v363 = vld [vmem:[%s237 + $0x270] sm:$0xff]
        %v364 = vld [vmem:[%s237 + $0x278] sm:$0xff]
        %v365 = vld [vmem:[%s237 + $0x280] sm:$0xff]
        %v366 = vld [vmem:[%s237 + $0x288] sm:$0xff]
        %v367 = vld [vmem:[%s237 + $0x290] sm:$0xff]
        %v368 = vld [vmem:[%s237 + $0x298] sm:$0xff]
        %v369 = vld [vmem:[%s237 + $0x2a0] sm:$0xff]
        %v370 = vld [vmem:[%s237 + $0x2a8] sm:$0xff]
        %v371 = vld [vmem:[%s237 + $0x2b0] sm:$0xff]
        %v372 = vld [vmem:[%s237 + $0x2b8] sm:$0xff]
        %v373 = vld [vmem:[%s237 + $0x2c0] sm:$0xff]
        %v374 = vld [vmem:[%s237 + $0x2c8] sm:$0xff]
        %v375 = vld [vmem:[%s237 + $0x2d0] sm:$0xff]
        %v376 = vld [vmem:[%s237 + $0x2d8] sm:$0xff]
        %v377 = vld [vmem:[%s237 + $0x2e0] sm:$0xff]
        %v378 = vld [vmem:[%s237 + $0x2e8] sm:$0xff]
        %v379 = vld [vmem:[%s237 + $0x2f0] sm:$0xff]
        %v380 = vld [vmem:[%s237 + $0x2f8] sm:$0xff]
        %v381 = vld [vmem:[%s237 + $0x300] sm:$0xff]
        %v382 = vld [vmem:[%s237 + $0x308] sm:$0xff]
        %v383 = vld [vmem:[%s237 + $0x310] sm:$0xff]
        %v384 = vld [vmem:[%s237 + $0x318] sm:$0xff]
        %v385 = vld [vmem:[%s237 + $0x320] sm:$0xff]
        %v386 = vld [vmem:[%s237 + $0x328] sm:$0xff]
        %v387 = vld [vmem:[%s237 + $0x330] sm:$0xff]
        %v388 = vld [vmem:[%s237 + $0x338] sm:$0xff]
        %v389 = vld [vmem:[%s237 + $0x340] sm:$0xff]
        %v390 = vld [vmem:[%s237 + $0x348] sm:$0xff]
        %v391 = vld [vmem:[%s237 + $0x350] sm:$0xff]
        %v392 = vld [vmem:[%s237 + $0x358] sm:$0xff]
        %v393 = vld [vmem:[%s237 + $0x360] sm:$0xff]
        %v394 = vld [vmem:[%s237 + $0x368] sm:$0xff]
        %v395 = vld [vmem:[%s237 + $0x370] sm:$0xff]
        %v396 = vld [vmem:[%s237 + $0x378] sm:$0xff]
        %v397 = vld [vmem:[%s237 + $0x380] sm:$0xff]
        %v398 = vld [vmem:[%s237 + $0x388] sm:$0xff]
        %v399 = vld [vmem:[%s237 + $0x390] sm:$0xff]
        %v400 = vld [vmem:[%s237 + $0x398] sm:$0xff]
        %v401 = vld [vmem:[%s237 + $0x3a0] sm:$0xff]
        %v402 = vld [vmem:[%s237 + $0x3a8] sm:$0xff]
        %v403 = vld [vmem:[%s237 + $0x3b0] sm:$0xff]
        %v404 = vld [vmem:[%s237 + $0x3b8] sm:$0xff]
        %v405 = vld [vmem:[%s237 + $0x3c0] sm:$0xff]
        %v406 = vld [vmem:[%s237 + $0x3c8] sm:$0xff]
        %v407 = vld [vmem:[%s237 + $0x3d0] sm:$0xff]
        %v408 = vld [vmem:[%s237 + $0x3d8] sm:$0xff]
        %v409 = vld [vmem:[%s237 + $0x3e0] sm:$0xff]
        %v410 = vld [vmem:[%s237 + $0x3e8] sm:$0xff]
        %v411 = vld [vmem:[%s237 + $0x3f0] sm:$0xff]
        %v412 = vld [vmem:[%s237 + $0x3f8] sm:$0xff]
        %413 = vmatprep.subr.mxu0 %v286
        %414 = vmatpush1.msra.mxu0 %v285
        %415 = vmatprep.subr.mxu0 %v288
        %416 = vmatpush1.msra.mxu0 %v287
        %417 = vmatprep.subr.mxu0 %v290
        %418 = vmatpush1.msra.mxu0 %v289
        %419 = vmatprep.subr.mxu0 %v292
        %420 = vmatpush1.msra.mxu0 %v291
        %421 = vmatprep.subr.mxu0 %v294
        %422 = vmatpush1.msra.mxu0 %v293
        %423 = vmatprep.subr.mxu0 %v296
        %424 = vmatpush1.msra.mxu0 %v295
        %425 = vmatprep.subr.mxu0 %v298
        %426 = vmatpush1.msra.mxu0 %v297
        %427 = vmatprep.subr.mxu0 %v300
        %428 = vmatpush1.msra.mxu0 %v299
        %429 = vmatprep.subr.mxu0 %v302
        %430 = vmatpush1.msra.mxu0 %v301
        %431 = vmatprep.subr.mxu0 %v304
        %432 = vmatpush1.msra.mxu0 %v303
        %433 = vmatprep.subr.mxu0 %v306
        %434 = vmatpush1.msra.mxu0 %v305
        %435 = vmatprep.subr.mxu0 %v308
        %436 = vmatpush1.msra.mxu0 %v307
        %437 = vmatprep.subr.mxu0 %v310
        %438 = vmatpush1.msra.mxu0 %v309
        %439 = vmatprep.subr.mxu0 %v312
        %440 = vmatpush1.msra.mxu0 %v311
        %441 = vmatprep.subr.mxu0 %v314
        %442 = vmatpush1.msra.mxu0 %v313
        %443 = vmatprep.subr.mxu0 %v316
        %444 = vmatpush1.msra.mxu0 %v315
        %445 = vmatprep.subr.mxu0 %v318
        %446 = vmatpush1.msra.mxu0 %v317
        %447 = vmatprep.subr.mxu0 %v320
        %448 = vmatpush1.msra.mxu0 %v319
        %449 = vmatprep.subr.mxu0 %v322
        %450 = vmatpush1.msra.mxu0 %v321
        %451 = vmatprep.subr.mxu0 %v324
        %452 = vmatpush1.msra.mxu0 %v323
        %453 = vmatprep.subr.mxu0 %v326
        %454 = vmatpush1.msra.mxu0 %v325
        %455 = vmatprep.subr.mxu0 %v328
        %456 = vmatpush1.msra.mxu0 %v327
        %457 = vmatprep.subr.mxu0 %v330
        %458 = vmatpush1.msra.mxu0 %v329
        %459 = vmatprep.subr.mxu0 %v332
        %460 = vmatpush1.msra.mxu0 %v331
        %461 = vmatprep.subr.mxu0 %v334
        %462 = vmatpush1.msra.mxu0 %v333
        %463 = vmatprep.subr.mxu0 %v336
        %464 = vmatpush1.msra.mxu0 %v335
        %465 = vmatprep.subr.mxu0 %v338
        %466 = vmatpush1.msra.mxu0 %v337
        %467 = vmatprep.subr.mxu0 %v340
        %468 = vmatpush1.msra.mxu0 %v339
        %469 = vmatprep.subr.mxu0 %v342
        %470 = vmatpush1.msra.mxu0 %v341
        %471 = vmatprep.subr.mxu0 %v344
        %472 = vmatpush1.msra.mxu0 %v343
        %473 = vmatprep.subr.mxu0 %v346
        %474 = vmatpush1.msra.mxu0 %v345
        %475 = vmatprep.subr.mxu0 %v348
        %476 = vmatpush1.msra.mxu0 %v347
        %477 = vmatprep.mubr.f32.mxu0 %v282
        %478 = vmatmul.mubr.f32.gmra.mrb[0].mxu0 %v281
        %v479 = vpop.f32.mrb[0].mxu0
        %v480 = vadd.f32 0.0, %v479
        %v481 = vpop.f32.mrb[0].mxu0
        %v482 = vadd.f32 0.0, %v481
        %483 = vdwg.mxu0
        %484 = vmatprep.subr.mxu0 %v350
        %485 = vmatpush1.msra.mxu0 %v349
        %486 = vmatprep.subr.mxu0 %v352
        %487 = vmatpush1.msra.mxu0 %v351
        %488 = vmatprep.subr.mxu0 %v354
        %489 = vmatpush1.msra.mxu0 %v353
        %490 = vmatprep.subr.mxu0 %v356
        %491 = vmatpush1.msra.mxu0 %v355
        %492 = vmatprep.subr.mxu0 %v358
        %493 = vmatpush1.msra.mxu0 %v357
        %494 = vmatprep.subr.mxu0 %v360
        %495 = vmatpush1.msra.mxu0 %v359
        %496 = vmatprep.subr.mxu0 %v362
        %497 = vmatpush1.msra.mxu0 %v361
        %498 = vmatprep.subr.mxu0 %v364
        %499 = vmatpush1.msra.mxu0 %v363
        %500 = vmatprep.subr.mxu0 %v366
        %501 = vmatpush1.msra.mxu0 %v365
        %502 = vmatprep.subr.mxu0 %v368
        %503 = vmatpush1.msra.mxu0 %v367
        %504 = vmatprep.subr.mxu0 %v370
        %505 = vmatpush1.msra.mxu0 %v369
        %506 = vmatprep.subr.mxu0 %v372
        %507 = vmatpush1.msra.mxu0 %v371
        %508 = vmatprep.subr.mxu0 %v374
        %509 = vmatpush1.msra.mxu0 %v373
        %510 = vmatprep.subr.mxu0 %v376
        %511 = vmatpush1.msra.mxu0 %v375
        %512 = vmatprep.subr.mxu0 %v378
        %513 = vmatpush1.msra.mxu0 %v377
        %514 = vmatprep.subr.mxu0 %v380
        %515 = vmatpush1.msra.mxu0 %v379
        %516 = vmatprep.subr.mxu0 %v382
        %517 = vmatpush1.msra.mxu0 %v381
        %518 = vmatprep.subr.mxu0 %v384
        %519 = vmatpush1.msra.mxu0 %v383
        %520 = vmatprep.subr.mxu0 %v386
        %521 = vmatpush1.msra.mxu0 %v385
        %522 = vmatprep.subr.mxu0 %v388
        %523 = vmatpush1.msra.mxu0 %v387
        %524 = vmatprep.subr.mxu0 %v390
        %525 = vmatpush1.msra.mxu0 %v389
        %526 = vmatprep.subr.mxu0 %v392
        %527 = vmatpush1.msra.mxu0 %v391
        %528 = vmatprep.subr.mxu0 %v394
        %529 = vmatpush1.msra.mxu0 %v393
        %530 = vmatprep.subr.mxu0 %v396
        %531 = vmatpush1.msra.mxu0 %v395
        %532 = vmatprep.subr.mxu0 %v398
        %533 = vmatpush1.msra.mxu0 %v397
        %534 = vmatprep.subr.mxu0 %v400
        %535 = vmatpush1.msra.mxu0 %v399
        %536 = vmatprep.subr.mxu0 %v402
        %537 = vmatpush1.msra.mxu0 %v401
        %538 = vmatprep.subr.mxu0 %v404
        %539 = vmatpush1.msra.mxu0 %v403
        %540 = vmatprep.subr.mxu0 %v406
        %541 = vmatpush1.msra.mxu0 %v405
        %542 = vmatprep.subr.mxu0 %v408
        %543 = vmatpush1.msra.mxu0 %v407
        %544 = vmatprep.subr.mxu0 %v410
        %545 = vmatpush1.msra.mxu0 %v409
        %546 = vmatprep.subr.mxu0 %v412
        %547 = vmatpush1.msra.mxu0 %v411
        %548 = vmatprep.mubr.f32.mxu0 %v284
        %549 = vmatmul.mubr.f32.gmra.mrb[0].mxu0 %v283
        %v550 = vpop.f32.mrb[0].mxu0
        %v551 = vadd.f32 %v480, %v550
        %v552 = vpop.f32.mrb[0].mxu0
        %v553 = vadd.f32 %v482, %v552
        %554 = vdwg.mxu0
        %v555 = vadd.f32 %v279, %v551
        %v556 = vadd.f32 %v280, %v553
        %557 = vst [vmem:[#allocation2] sm:$0xff] %v555
        %558 = vst [vmem:[#allocation2 + $0x8] sm:$0xff] %v556
        %p559 = scmp.eq.s32.totalorder %s28, 1
        // Predicated region
        $region45: #{tpu_custom_call.1} parent=31 // pred_check
          %p560 = pneg %p559
        $region46: #{tpu_custom_call.1} parent=31 // pred_check_branch
          %562 = sbr.rel (%p560) target = $region48
        $region47: #{tpu_custom_call.1} parent=31 // pred_region
          %v563 = vld [vmem:[#allocation2] sm:$0xff]
          %v564 = vld [vmem:[#allocation2 + $0x8] sm:$0xff]
          %v565 = vld [vmem:[%s270] sm:$0x3]
          %v567 = vlaneseq
          %v568 = vshrl.u32 %v567, 7
          %v569 = vsub.s32 0, %v568
          %v570 = vrot.slane %v565, %v569
          %v571 = vlaneseq
          %v572 = vshrl.u32 %v571, 7
          %v573 = vsub.s32 1, %v572
          %v574 = vrot.slane %v565, %v573
          %v577 = vadd.f32 %v563, %v570
          %v578 = vadd.f32 %v564, %v574
          %579 = vst [vmem:[#allocation8] sm:$0xff] %v577
          %580 = vst [vmem:[#allocation8 + $0x8] sm:$0xff] %v578
        $region48: #{tpu_custom_call.1} parent=31 // pred_fallthru
          _
        // Predicated region
        $region49: #{tpu_custom_call.1} parent=31 // pred_check
          %p581 = pneg %p142
        $region50: #{tpu_custom_call.1} parent=31 // pred_check_branch
          %583 = sbr.rel (%p581) target = $region52
        $region51: #{tpu_custom_call.1} parent=31 // pred_region
          %s584 = smul.u32 2, %s27
          %s586 = ssub.s32 256, 256
          %587 = vsyncadd [#allocation5], %s586
          %s588 = smul.addr %s26, 2
          %s589 = sadd.s32 %s584, %s588
          %s590 = smul.addr %s589, 128
          %s591 = scalar_lea.hbm %s3, %s590
          %s593 = sshll.u32 [#allocation8], 4
          %s594 = int_to_ptr.vmem [resolvable:$true] %s593
          %596 = dma.vmem_to_hbm [thread:$0]  %s594, 256, %s591, [#allocation5]
        $region52: #{tpu_custom_call.1} parent=31 // pred_fallthru
          _
        // Predicated region
        $region53: #{tpu_custom_call.1} parent=31 // pred_check
          %p597 = pneg %p142
        $region54: #{tpu_custom_call.1} parent=31 // pred_check_branch
          %599 = sbr.rel (%p597) target = $region56
        $region55: #{tpu_custom_call.1} parent=31 // pred_region
          %600 = dma.done [#allocation5], 256
        $region56: #{tpu_custom_call.1} parent=31 // pred_fallthru
          _
      $region32: #{tpu_custom_call.1} parent=5 // pred_fallthru
        _
      %p601 = scmp.le.s32.totalorder 2, %s16
      // Predicated region
      $region57: #{tpu_custom_call.1} parent=5 // pred_check
        %p602 = pneg %p601
      $region58: #{tpu_custom_call.1} parent=5 // pred_check_branch
        %604 = sbr.rel (%p602) target = $region60
      $region59: #{tpu_custom_call.1} parent=5 // pred_region
        %s605 = ssub.s32 %s16, 2
      $region60: #{tpu_custom_call.1} parent=5 // pred_fallthru
        _
    $region6: #{tpu_custom_call.1} parent=1 // loop_footer
      %s20 = sadd.s32 1, %s16
    $region7: #{tpu_custom_call.1} parent=1 // loop_footer_branch
      %15 = sbr.rel target = $region3
    $region8: #{tpu_custom_call.1} parent=1 // loop_exit
      _
    %606 = vsyncpa [#allocation4], 1
    %s607 = scalar_lea.sflag [#allocation4], 1
    %608 = vsyncpa %s607, 1
    %609 = vsyncpa [#allocation7], 1
    %s610 = scalar_lea.sflag [#allocation7], 1
    %611 = vsyncpa %s610, 1
    %612 = vsyncpa [#allocation5], 1
    %s613 = scalar_lea.sflag [#allocation5], 1
    %614 = vsyncpa %s613, 1

</llo_original>
